<compile_context>
chip_gen: v5e
topology: v5e:2x2
jax: 0.10.0
libtpu: 0.0.40
codegen_flags: <defaults>
</compile_context>

<pallas_src>
import functools

import jax
import jax.numpy as jnp
from jax import lax
from jax.experimental import pallas as pl
from jax.experimental.pallas import tpu as pltpu


def _round_up(v, m):
    return (v + m - 1) // m * m


def _gated_mlp_kernel(x_ref, w1_ref, b1_ref, w2_ref, b2_ref, o_ref, *, hidden):
    """One grid step: a (TM, Dp) block of tokens end-to-end, fully fused in VMEM.

    w1_ref: (2*Hp, Dp)  PyTorch layout (out, in) -> contracted on dim 1
    w2_ref: (Dp, Hp)    PyTorch layout (out, in) -> contracted on dim 1
    """
    nt_dims = (((1,), (1,)), ((), ()))  # A @ B^T on the MXU, no data movement

    x = x_ref[...]                                                   # (TM, Dp), compute dtype

    # fc_1 (fused y+gate halves): (TM, Dp) x (2Hp, Dp)^T -> (TM, 2Hp), f32 accumulate
    yz = lax.dot_general(x, w1_ref[...], dimension_numbers=nt_dims,
                         preferred_element_type=jnp.float32)
    yz = yz + b1_ref[...]                                            # (TM, 2Hp) f32

    # chunk(dim=-1): first Hp columns = y, last Hp = gate (split point is 128-aligned, static)
    y = yz[:, :hidden]
    g = yz[:, hidden:]

    # y * SiLU(gate), kept in f32 (VPU + EUP sigmoid)
    h = y * (g * jax.nn.sigmoid(g))                                  # (TM, Hp) f32

    # fc_2: (TM, Hp) x (Dp, Hp)^T -> (TM, Dp), f32 accumulate
    out = lax.dot_general(h.astype(w2_ref.dtype), w2_ref[...],
                          dimension_numbers=nt_dims,
                          preferred_element_type=jnp.float32)
    out = out + b2_ref[...]

    # TODO(synk): nn.Dropout is identity in eval mode; training-mode dropout not implemented.
    o_ref[...] = out.astype(o_ref.dtype)


@functools.partial(jax.jit, static_argnames=("block_m", "compute_dtype"))
def gated_mlp(x, w1, b1, w2, b2, *, block_m=256, compute_dtype=jnp.bfloat16):
    """x: (B, S, D). w1: (2H, D), b1: (2H,), w2: (D, H), b2: (D,)  (PyTorch nn.Linear layout)."""
    B, S, D = x.shape
    H = w1.shape[0] // 2
    out_dtype = x.dtype

    # Lane-dense padded extents (multiples of 128); no-ops when the config already is.
    Dp = _round_up(D, 128)
    Hp = _round_up(H, 128)

    # Token tiling: at least 128 rows per MXU pass (default 256); pad M to a tile multiple.
    M = B * S
    TM = min(_round_up(block_m, 128), _round_up(M, 128))
    Mp = _round_up(M, TM)

    # ---- wrapper-side packing (pad only; NO transposes — dot_general handles the layout) ----
    xf = x.reshape(M, D).astype(compute_dtype)
    x_pad = jnp.zeros((Mp, Dp), compute_dtype).at[:M, :D].set(xf)

    # Keep the y/gate split point at Hp so the in-kernel chunk stays 128-aligned.
    w1p = jnp.zeros((2 * Hp, Dp), compute_dtype)
    w1p = w1p.at[:H, :D].set(w1[:H].astype(compute_dtype))
    w1p = w1p.at[Hp:Hp + H, :D].set(w1[H:].astype(compute_dtype))
    b1p = jnp.zeros((1, 2 * Hp), jnp.float32)
    b1p = b1p.at[0, :H].set(b1[:H].astype(jnp.float32))
    b1p = b1p.at[0, Hp:Hp + H].set(b1[H:].astype(jnp.float32))

    w2p = jnp.zeros((Dp, Hp), compute_dtype).at[:D, :H].set(w2.astype(compute_dtype))
    b2p = jnp.zeros((1, Dp), jnp.float32).at[0, :D].set(b2.astype(jnp.float32))

    # ---- explicit scoped-VMEM budget (resident weights + double-buffered tiles + f32 temps) ----
    cd_b = jnp.dtype(compute_dtype).itemsize
    out_b = jnp.dtype(out_dtype).itemsize
    est = (2 * TM * Dp * cd_b                 # x tile, double buffered
           + 2 * TM * Dp * out_b              # out tile, double buffered
           + 2 * (2 * Hp) * Dp * cd_b         # fused fc1 weight buffers
           + 2 * Hp * Dp * cd_b               # fc2 weight buffers
           + 2 * (2 * Hp + Dp) * 4            # biases (f32)
           + TM * (3 * Hp + Dp) * 4)          # in-kernel f32 intermediates
    # Clamp to [32 MiB, 60 MiB]: large enough headroom, legal on v5e/v6e and v7x (64 MiB/TC).
    vmem_limit = int(min(max(2 * est, 32 * 1024 * 1024), 60 * 1024 * 1024))

    grid = (Mp // TM,)
    out = pl.pallas_call(
        functools.partial(_gated_mlp_kernel, hidden=Hp),
        out_shape=jax.ShapeDtypeStruct((Mp, Dp), out_dtype),
        grid_spec=pltpu.PrefetchScalarGridSpec(
            num_scalar_prefetch=0,
            grid=grid,
            in_specs=[
                pl.BlockSpec((TM, Dp), lambda i: (i, 0)),        # x tile (streams over tokens)
                pl.BlockSpec((2 * Hp, Dp), lambda i: (0, 0)),    # fused fc1 weight (resident)
                pl.BlockSpec((1, 2 * Hp), lambda i: (0, 0)),     # fc1 bias
                pl.BlockSpec((Hp, Dp), lambda i: (0, 0)),        # fc2 weight (resident)
                pl.BlockSpec((1, Dp), lambda i: (0, 0)),         # fc2 bias
            ],
            out_specs=pl.BlockSpec((TM, Dp), lambda i: (i, 0)),
        ),
        compiler_params=pltpu.CompilerParams(
            dimension_semantics=("parallel",),   # token axis shards across TensorCores
            vmem_limit_bytes=vmem_limit,
        ),
    )(x_pad, w1p, b1p, w2p, b2p)

    return out[:M, :D].reshape(B, S, D)


def _reference(x, w1, b1, w2, b2):
    """Pure-JAX reference mirroring the PyTorch forward (eval mode), full f32 precision."""
    hi = jax.lax.Precision.HIGHEST
    y = jnp.einsum("bsd,hd->bsh", x, w1, precision=hi) + b1
    H = w1.shape[0] // 2
    yh, gate = y[..., :H], y[..., H:]
    h = yh * (gate * jax.nn.sigmoid(gate))
    return jnp.einsum("bsh,dh->bsd", h, w2, precision=hi) + b2


if __name__ == "__main__":
    # Config: d_model=32, mlp_scale=2.0 -> hidden=64, bias=True, dropout=0.0 (eval)
    d_model, mlp_scale = 32, 2.0
    hidden = int(mlp_scale * d_model)
    B, S = 2, 8

    key = jax.random.PRNGKey(0)
    k_x, k_w1, k_b1, k_w2, k_b2 = jax.random.split(key, 5)

    x = jax.random.normal(k_x, (B, S, d_model), dtype=jnp.float32)
    # Params match nn.Linear layout: weight (out, in), bias (out,)
    w1 = jax.random.normal(k_w1, (2 * hidden, d_model), dtype=jnp.float32) * 0.05
    b1 = jax.random.normal(k_b1, (2 * hidden,), dtype=jnp.float32) * 0.05
    w2 = jax.random.normal(k_w2, (d_model, hidden), dtype=jnp.float32) * 0.05
    b2 = jax.random.normal(k_b2, (d_model,), dtype=jnp.float32) * 0.05

    ref = _reference(x, w1, b1, w2, b2)

    # Default (perf) path: bf16 MXU matmuls, f32 accumulation -> loosened tolerance.
    out_bf16 = jax.block_until_ready(gated_mlp(x, w1, b1, w2, b2))
    assert out_bf16.shape == (B, S, d_model)
    assert jnp.allclose(out_bf16, ref, atol=2e-2, rtol=2e-2), "bf16 path mismatch vs reference"

    # Full-precision path: f32 matmuls, tight tolerance.
    out_f32 = jax.block_until_ready(
        gated_mlp(x, w1, b1, w2, b2, compute_dtype=jnp.float32))
    assert jnp.allclose(out_f32, ref, atol=2e-3, rtol=2e-3), "f32 path mismatch vs reference"

    print("KERNEL_OK")
</pallas_src>

<mosaic_0001>
module attributes {stable_mosaic.version = 11 : i64} {
  func.func @_gated_mlp_kernel(%arg0: i32, %arg1: memref<128x128xbf16, #tpu.memory_space<vmem>>, %arg2: memref<256x128xbf16, #tpu.memory_space<vmem>>, %arg3: memref<1x256xf32, #tpu.memory_space<vmem>>, %arg4: memref<128x128xbf16, #tpu.memory_space<vmem>>, %arg5: memref<1x128xf32, #tpu.memory_space<vmem>>, %arg6: memref<128x128xf32, #tpu.memory_space<vmem>>) attributes {dimension_semantics = [#tpu.dimension_semantics<parallel>], iteration_bounds = array<i64: 1>, scalar_prefetch = 0 : i64, scratch_operands = 0 : i64, tpu.core_type = #tpu.core_type<tc>, window_params = [{transform_indices = @transform_0, window_bounds = array<i64: 128, 128>}, {pipeline_mode = #tpu.pipeline_mode<synchronous>, transform_indices = @transform_1, window_bounds = array<i64: 256, 128>}, {pipeline_mode = #tpu.pipeline_mode<synchronous>, transform_indices = @transform_2, window_bounds = array<i64: 1, 256>}, {pipeline_mode = #tpu.pipeline_mode<synchronous>, transform_indices = @transform_3, window_bounds = array<i64: 128, 128>}, {pipeline_mode = #tpu.pipeline_mode<synchronous>, transform_indices = @transform_4, window_bounds = array<i64: 1, 128>}, {transform_indices = @transform_5, window_bounds = array<i64: 128, 128>}]} {
    %c0 = arith.constant 0 : index
    %c0_0 = arith.constant 0 : index
    %0 = vector.load %arg1[%c0, %c0_0] : memref<128x128xbf16, #tpu.memory_space<vmem>>, vector<128x128xbf16>
    %c0_1 = arith.constant 0 : index
    %c0_2 = arith.constant 0 : index
    %1 = vector.load %arg2[%c0_1, %c0_2] : memref<256x128xbf16, #tpu.memory_space<vmem>>, vector<256x128xbf16>
    %cst = arith.constant dense<0.000000e+00> : vector<128x256xf32>
    %2 = tpu.matmul %0, %1, %cst {dimension_numbers = #tpu.dot_dimension_numbers<[1], [1], [0], [0], [0, 0, 1, 0], [], []>} : vector<128x128xbf16>, vector<256x128xbf16>, vector<128x256xf32> -> vector<128x256xf32>
    %c0_3 = arith.constant 0 : index
    %c0_4 = arith.constant 0 : index
    %3 = vector.load %arg3[%c0_3, %c0_4] : memref<1x256xf32, #tpu.memory_space<vmem>>, vector<1x256xf32>
    %4 = vector.broadcast %3 : vector<1x256xf32> to vector<128x256xf32>
    %5 = arith.addf %2, %4 : vector<128x256xf32>
    %6 = vector.extract_strided_slice %5 {offsets = [0, 0], sizes = [128, 128], strides = [1, 1]} : vector<128x256xf32> to vector<128x128xf32>
    %7 = vector.extract_strided_slice %5 {offsets = [0, 128], sizes = [128, 128], strides = [1, 1]} : vector<128x256xf32> to vector<128x128xf32>
    %8 = arith.negf %7 : vector<128x128xf32>
    %9 = math.exp %8 : vector<128x128xf32>
    %cst_5 = arith.constant 1.000000e+00 : f32
    %10 = vector.broadcast %cst_5 : f32 to vector<128x128xf32>
    %11 = arith.addf %10, %9 : vector<128x128xf32>
    %12 = arith.divf %10, %11 : vector<128x128xf32>
    %13 = arith.mulf %7, %12 : vector<128x128xf32>
    %14 = arith.mulf %6, %13 : vector<128x128xf32>
    %15 = arith.truncf %14 : vector<128x128xf32> to vector<128x128xbf16>
    %c0_6 = arith.constant 0 : index
    %c0_7 = arith.constant 0 : index
    %16 = vector.load %arg4[%c0_6, %c0_7] : memref<128x128xbf16, #tpu.memory_space<vmem>>, vector<128x128xbf16>
    %cst_8 = arith.constant dense<0.000000e+00> : vector<128x128xf32>
    %17 = tpu.matmul %15, %16, %cst_8 {dimension_numbers = #tpu.dot_dimension_numbers<[1], [1], [0], [0], [0, 0, 1, 0], [], []>} : vector<128x128xbf16>, vector<128x128xbf16>, vector<128x128xf32> -> vector<128x128xf32>
    %c0_9 = arith.constant 0 : index
    %c0_10 = arith.constant 0 : index
    %18 = vector.load %arg5[%c0_9, %c0_10] : memref<1x128xf32, #tpu.memory_space<vmem>>, vector<1x128xf32>
    %19 = vector.broadcast %18 : vector<1x128xf32> to vector<128x128xf32>
    %20 = arith.addf %17, %19 : vector<128x128xf32>
    %c0_11 = arith.constant 0 : index
    %c0_12 = arith.constant 0 : index
    %21 = vector.load %arg6[%c0_11, %c0_12] : memref<128x128xf32, #tpu.memory_space<vmem>>, vector<128x128xf32>
    tpu.vector_store %arg6[%c0_11, %c0_12], %20 {strides = array<i32>} : memref<128x128xf32, #tpu.memory_space<vmem>>, vector<128x128xf32>,
    return
  }
  func.func @transform_0(%arg0: i32) -> (i32, i32) {
    %c0_i32 = arith.constant 0 : i32
    %c0_i32_0 = arith.constant 0 : i32
    return %arg0, %c0_i32 : i32, i32
  }
  func.func @transform_1(%arg0: i32) -> (i32, i32) {
    %c0_i32 = arith.constant 0 : i32
    %c0_i32_0 = arith.constant 0 : i32
    %c0_i32_1 = arith.constant 0 : i32
    return %c0_i32, %c0_i32_0 : i32, i32
  }
  func.func @transform_2(%arg0: i32) -> (i32, i32) {
    %c0_i32 = arith.constant 0 : i32
    %c0_i32_0 = arith.constant 0 : i32
    %c0_i32_1 = arith.constant 0 : i32
    return %c0_i32, %c0_i32_0 : i32, i32
  }
  func.func @transform_3(%arg0: i32) -> (i32, i32) {
    %c0_i32 = arith.constant 0 : i32
    %c0_i32_0 = arith.constant 0 : i32
    %c0_i32_1 = arith.constant 0 : i32
    return %c0_i32, %c0_i32_0 : i32, i32
  }
  func.func @transform_4(%arg0: i32) -> (i32, i32) {
    %c0_i32 = arith.constant 0 : i32
    %c0_i32_0 = arith.constant 0 : i32
    %c0_i32_1 = arith.constant 0 : i32
    return %c0_i32, %c0_i32_0 : i32, i32
  }
  func.func @transform_5(%arg0: i32) -> (i32, i32) {
    %c0_i32 = arith.constant 0 : i32
    %c0_i32_0 = arith.constant 0 : i32
    return %arg0, %c0_i32 : i32, i32
  }
}

</mosaic_0001>

<llo_original>
// kernel: gated_mlp.1
$region0: #{gated_mlp.1}
  #allocation0 [shape = 'u32[]', space=smem, size = 0x4, offset = 0x4, fixed_abs, tag = 'smem constant byte address 0x4 - core index']
  #allocation1 [shape = 'u32[72,128]{1,0:T(1,128)}', space=vmem, size = 0x9000, scoped, tag = 'internal scratch']
  %s0 = inlined_call_operand.vmem [shape: bf16[128,128], index: 0, kind: input, shape index: {}]
  %s1 = inlined_call_operand.vmem [shape: bf16[256,128], index: 1, kind: input, shape index: {}]
  %s2 = inlined_call_operand.vmem [shape: f32[1,256], index: 2, kind: input, shape index: {}]
  %s3 = inlined_call_operand.vmem [shape: bf16[128,128], index: 3, kind: input, shape index: {}]
  %s4 = inlined_call_operand.vmem [shape: f32[1,128], index: 4, kind: input, shape index: {}]
  %s5 = inlined_call_operand.vmem [shape: f32[128,128], index: 5, kind: output, shape index: {}]
  %s6 = sld [smem:[#allocation0]]
  $region30: #{gated_mlp.1} parent=0
    _
  %s8 = ssub.s32 1, %s6
  %s9 = scalar_select 0, %s8, %s6
  // Predicated region
  $region2: #{gated_mlp.1} parent=0 // pred_check
    _
  $region3: #{gated_mlp.1} parent=0 // pred_check_branch
    %11 = sbr.rel (0) target = $region5
  $region4: #{gated_mlp.1} parent=0 // pred_region
    _
  $region5: #{gated_mlp.1} parent=0 // pred_fallthru
    _
  // Predicated region
  $region6: #{gated_mlp.1} parent=0 // pred_check
    _
  $region7: #{gated_mlp.1} parent=0 // pred_check_branch
    %13 = sbr.rel (0) target = $region9
  $region8: #{gated_mlp.1} parent=0 // pred_region
    _
  $region9: #{gated_mlp.1} parent=0 // pred_fallthru
    _
  // Predicated region
  $region10: #{gated_mlp.1} parent=0 // pred_check
    _
  $region11: #{gated_mlp.1} parent=0 // pred_check_branch
    %15 = sbr.rel (0) target = $region13
  $region12: #{gated_mlp.1} parent=0 // pred_region
    _
  $region13: #{gated_mlp.1} parent=0 // pred_fallthru
    _
  // Predicated region
  $region14: #{gated_mlp.1} parent=0 // pred_check
    _
  $region15: #{gated_mlp.1} parent=0 // pred_check_branch
    %17 = sbr.rel (0) target = $region17
  $region16: #{gated_mlp.1} parent=0 // pred_region
    _
  $region17: #{gated_mlp.1} parent=0 // pred_fallthru
    _
  // Predicated region
  $region18: #{gated_mlp.1} parent=0 // pred_check
    _
  $region19: #{gated_mlp.1} parent=0 // pred_check_branch
    %19 = sbr.rel (0) target = $region21
  $region20: #{gated_mlp.1} parent=0 // pred_region
    _
  $region21: #{gated_mlp.1} parent=0 // pred_fallthru
    _
  %v20 = vld [vmem:[%s0] sm:$0xf]
  %v21 = vld [vmem:[%s0 + $0x4] sm:$0xf]
  %v22 = vld [vmem:[%s0 + $0x8] sm:$0xf]
  %v23 = vld [vmem:[%s0 + $0xc] sm:$0xf]
  %v24 = vld [vmem:[%s0 + $0x10] sm:$0xf]
  %v25 = vld [vmem:[%s0 + $0x14] sm:$0xf]
  %v26 = vld [vmem:[%s0 + $0x18] sm:$0xf]
  %v27 = vld [vmem:[%s0 + $0x1c] sm:$0xf]
  %v28 = vld [vmem:[%s0 + $0x20] sm:$0xf]
  %v29 = vld [vmem:[%s0 + $0x24] sm:$0xf]
  %v30 = vld [vmem:[%s0 + $0x28] sm:$0xf]
  %v31 = vld [vmem:[%s0 + $0x2c] sm:$0xf]
  %v32 = vld [vmem:[%s0 + $0x30] sm:$0xf]
  %v33 = vld [vmem:[%s0 + $0x34] sm:$0xf]
  %v34 = vld [vmem:[%s0 + $0x38] sm:$0xf]
  %v35 = vld [vmem:[%s0 + $0x3c] sm:$0xf]
  %v36 = vld [vmem:[%s1] sm:$0xf]
  %v37 = vld [vmem:[%s1 + $0x4] sm:$0xf]
  %v38 = vld [vmem:[%s1 + $0x8] sm:$0xf]
  %v39 = vld [vmem:[%s1 + $0xc] sm:$0xf]
  %v40 = vld [vmem:[%s1 + $0x10] sm:$0xf]
  %v41 = vld [vmem:[%s1 + $0x14] sm:$0xf]
  %v42 = vld [vmem:[%s1 + $0x18] sm:$0xf]
  %v43 = vld [vmem:[%s1 + $0x1c] sm:$0xf]
  %v44 = vld [vmem:[%s1 + $0x20] sm:$0xf]
  %v45 = vld [vmem:[%s1 + $0x24] sm:$0xf]
  %v46 = vld [vmem:[%s1 + $0x28] sm:$0xf]
  %v47 = vld [vmem:[%s1 + $0x2c] sm:$0xf]
  %v48 = vld [vmem:[%s1 + $0x30] sm:$0xf]
  %v49 = vld [vmem:[%s1 + $0x34] sm:$0xf]
  %v50 = vld [vmem:[%s1 + $0x38] sm:$0xf]
  %v51 = vld [vmem:[%s1 + $0x3c] sm:$0xf]
  %v52 = vld [vmem:[%s1 + $0x40] sm:$0xf]
  %v53 = vld [vmem:[%s1 + $0x44] sm:$0xf]
  %v54 = vld [vmem:[%s1 + $0x48] sm:$0xf]
  %v55 = vld [vmem:[%s1 + $0x4c] sm:$0xf]
  %v56 = vld [vmem:[%s1 + $0x50] sm:$0xf]
  %v57 = vld [vmem:[%s1 + $0x54] sm:$0xf]
  %v58 = vld [vmem:[%s1 + $0x58] sm:$0xf]
  %v59 = vld [vmem:[%s1 + $0x5c] sm:$0xf]
  %v60 = vld [vmem:[%s1 + $0x60] sm:$0xf]
  %v61 = vld [vmem:[%s1 + $0x64] sm:$0xf]
  %v62 = vld [vmem:[%s1 + $0x68] sm:$0xf]
  %v63 = vld [vmem:[%s1 + $0x6c] sm:$0xf]
  %v64 = vld [vmem:[%s1 + $0x70] sm:$0xf]
  %v65 = vld [vmem:[%s1 + $0x74] sm:$0xf]
  %v66 = vld [vmem:[%s1 + $0x78] sm:$0xf]
  %v67 = vld [vmem:[%s1 + $0x7c] sm:$0xf]
  %v68 = vld [vmem:[%s2] sm:$0x3]
  %v70 = vperm.slane %v68, 0
  %v71 = vperm.slane %v68, 1
  %v90 = vunpack.c.l.b16 %v20
  %v91 = vunpack.c.l.b16 %v21
  %v92 = vunpack.c.l.b16 %v22
  %v93 = vunpack.c.l.b16 %v23
  %v94 = vunpack.c.l.b16 %v24
  %v95 = vunpack.c.l.b16 %v25
  %v96 = vunpack.c.l.b16 %v26
  %v97 = vunpack.c.l.b16 %v27
  %v98 = vunpack.c.l.b16 %v28
  %v99 = vunpack.c.l.b16 %v29
  %v100 = vunpack.c.l.b16 %v30
  %v101 = vunpack.c.l.b16 %v31
  %v102 = vunpack.c.l.b16 %v32
  %v103 = vunpack.c.l.b16 %v33
  %v104 = vunpack.c.l.b16 %v34
  %v105 = vunpack.c.l.b16 %v35
  %v106 = vpack.c.b16 %v91, %v90
  %v107 = vpack.c.b16 %v93, %v92
  %v108 = vpack.c.b16 %v95, %v94
  %v109 = vpack.c.b16 %v97, %v96
  %v110 = vpack.c.b16 %v99, %v98
  %v111 = vpack.c.b16 %v101, %v100
  %v112 = vpack.c.b16 %v103, %v102
  %v113 = vpack.c.b16 %v105, %v104
  %v154 = vunpack.c.l.b16 %v36
  %v155 = vunpack.c.l.b16 %v37
  %v156 = vunpack.c.l.b16 %v38
  %v157 = vunpack.c.l.b16 %v39
  %v158 = vunpack.c.l.b16 %v40
  %v159 = vunpack.c.l.b16 %v41
  %v160 = vunpack.c.l.b16 %v42
  %v161 = vunpack.c.l.b16 %v43
  %v162 = vunpack.c.l.b16 %v44
  %v163 = vunpack.c.l.b16 %v45
  %v164 = vunpack.c.l.b16 %v46
  %v165 = vunpack.c.l.b16 %v47
  %v166 = vunpack.c.l.b16 %v48
  %v167 = vunpack.c.l.b16 %v49
  %v168 = vunpack.c.l.b16 %v50
  %v169 = vunpack.c.l.b16 %v51
  %v170 = vunpack.c.l.b16 %v52
  %v171 = vunpack.c.l.b16 %v53
  %v172 = vunpack.c.l.b16 %v54
  %v173 = vunpack.c.l.b16 %v55
  %v174 = vunpack.c.l.b16 %v56
  %v175 = vunpack.c.l.b16 %v57
  %v176 = vunpack.c.l.b16 %v58
  %v177 = vunpack.c.l.b16 %v59
  %v178 = vunpack.c.l.b16 %v60
  %v179 = vunpack.c.l.b16 %v61
  %v180 = vunpack.c.l.b16 %v62
  %v181 = vunpack.c.l.b16 %v63
  %v182 = vunpack.c.l.b16 %v64
  %v183 = vunpack.c.l.b16 %v65
  %v184 = vunpack.c.l.b16 %v66
  %v185 = vunpack.c.l.b16 %v67
  %v186 = vpack.c.b16 %v155, %v154
  %v187 = vpack.c.b16 %v157, %v156
  %v188 = vpack.c.b16 %v159, %v158
  %v189 = vpack.c.b16 %v161, %v160
  %v190 = vpack.c.b16 %v163, %v162
  %v191 = vpack.c.b16 %v165, %v164
  %v192 = vpack.c.b16 %v167, %v166
  %v193 = vpack.c.b16 %v169, %v168
  %v194 = vpack.c.b16 %v171, %v170
  %v195 = vpack.c.b16 %v173, %v172
  %v196 = vpack.c.b16 %v175, %v174
  %v197 = vpack.c.b16 %v177, %v176
  %v198 = vpack.c.b16 %v179, %v178
  %v199 = vpack.c.b16 %v181, %v180
  %v200 = vpack.c.b16 %v183, %v182
  %v201 = vpack.c.b16 %v185, %v184
  %218 = vmatpush.bf16.xpose.msra.mxu0 %v193
  %219 = vmatpush.bf16.xpose.msra.mxu0 %v192
  %220 = vmatpush.bf16.xpose.msra.mxu0 %v191
  %221 = vmatpush.bf16.xpose.msra.mxu0 %v190
  %222 = vmatpush.bf16.xpose.msra.mxu0 %v189
  %223 = vmatpush.bf16.xpose.msra.mxu0 %v188
  %224 = vmatpush.bf16.xpose.msra.mxu0 %v187
  %225 = vmatpush.bf16.xpose.msra.mxu0 %v186
  %226 = vmatmul.bf16.gmra.mxu0 %v106
  %v227 = vpop.f32.mrf.mxu0
  %v228 = vadd.f32 %v70, %v227
  %v229 = vpop.f32.mrf.mxu0
  %v230 = vadd.f32 %v70, %v229
  %231 = vmatmul.bf16.gmra.mxu0 %v107
  %v232 = vpop.f32.mrf.mxu0
  %v233 = vadd.f32 %v70, %v232
  %v234 = vpop.f32.mrf.mxu0
  %v235 = vadd.f32 %v70, %v234
  %236 = vmatmul.bf16.gmra.mxu0 %v108
  %v237 = vpop.f32.mrf.mxu0
  %v238 = vadd.f32 %v70, %v237
  %v239 = vpop.f32.mrf.mxu0
  %v240 = vadd.f32 %v70, %v239
  %241 = vmatmul.bf16.gmra.mxu0 %v109
  %v242 = vpop.f32.mrf.mxu0
  %v243 = vadd.f32 %v70, %v242
  %v244 = vpop.f32.mrf.mxu0
  %v245 = vadd.f32 %v70, %v244
  %246 = vmatmul.bf16.gmra.mxu0 %v110
  %v247 = vpop.f32.mrf.mxu0
  %v248 = vadd.f32 %v70, %v247
  %v249 = vpop.f32.mrf.mxu0
  %v250 = vadd.f32 %v70, %v249
  %251 = vmatmul.bf16.gmra.mxu0 %v111
  %v252 = vpop.f32.mrf.mxu0
  %v253 = vadd.f32 %v70, %v252
  %v254 = vpop.f32.mrf.mxu0
  %v255 = vadd.f32 %v70, %v254
  %256 = vmatmul.bf16.gmra.mxu0 %v112
  %v257 = vpop.f32.mrf.mxu0
  %v258 = vadd.f32 %v70, %v257
  %v259 = vpop.f32.mrf.mxu0
  %v260 = vadd.f32 %v70, %v259
  %261 = vmatmul.bf16.gmra.mxu0 %v113
  %v262 = vpop.f32.mrf.mxu0
  %v263 = vadd.f32 %v70, %v262
  %v264 = vpop.f32.mrf.mxu0
  %v265 = vadd.f32 %v70, %v264
  %266 = vdwg.mxu0
  %267 = vmatpush.bf16.xpose.msra.mxu0 %v201
  %268 = vmatpush.bf16.xpose.msra.mxu0 %v200
  %269 = vmatpush.bf16.xpose.msra.mxu0 %v199
  %270 = vmatpush.bf16.xpose.msra.mxu0 %v198
  %271 = vmatpush.bf16.xpose.msra.mxu0 %v197
  %272 = vmatpush.bf16.xpose.msra.mxu0 %v196
  %273 = vmatpush.bf16.xpose.msra.mxu0 %v195
  %274 = vmatpush.bf16.xpose.msra.mxu0 %v194
  %275 = vmatmul.bf16.gmra.mxu0 %v106
  %v276 = vpop.f32.mrf.mxu0
  %v277 = vadd.f32 %v71, %v276
  %v278 = vpop.f32.mrf.mxu0
  %v279 = vadd.f32 %v71, %v278
  %280 = vmatmul.bf16.gmra.mxu0 %v107
  %v281 = vpop.f32.mrf.mxu0
  %v282 = vadd.f32 %v71, %v281
  %v283 = vpop.f32.mrf.mxu0
  %v284 = vadd.f32 %v71, %v283
  %285 = vmatmul.bf16.gmra.mxu0 %v108
  %v286 = vpop.f32.mrf.mxu0
  %v287 = vadd.f32 %v71, %v286
  %v288 = vpop.f32.mrf.mxu0
  %v289 = vadd.f32 %v71, %v288
  %290 = vmatmul.bf16.gmra.mxu0 %v109
  %v291 = vpop.f32.mrf.mxu0
  %v292 = vadd.f32 %v71, %v291
  %v293 = vpop.f32.mrf.mxu0
  %v294 = vadd.f32 %v71, %v293
  %295 = vmatmul.bf16.gmra.mxu0 %v110
  %v296 = vpop.f32.mrf.mxu0
  %v297 = vadd.f32 %v71, %v296
  %v298 = vpop.f32.mrf.mxu0
  %v299 = vadd.f32 %v71, %v298
  %300 = vmatmul.bf16.gmra.mxu0 %v111
  %v301 = vpop.f32.mrf.mxu0
  %v302 = vadd.f32 %v71, %v301
  %v303 = vpop.f32.mrf.mxu0
  %v304 = vadd.f32 %v71, %v303
  %305 = vmatmul.bf16.gmra.mxu0 %v112
  %v306 = vpop.f32.mrf.mxu0
  %v307 = vadd.f32 %v71, %v306
  %v308 = vpop.f32.mrf.mxu0
  %v309 = vadd.f32 %v71, %v308
  %310 = vmatmul.bf16.gmra.mxu0 %v113
  %v311 = vpop.f32.mrf.mxu0
  %v312 = vadd.f32 %v71, %v311
  %v313 = vpop.f32.mrf.mxu0
  %v314 = vadd.f32 %v71, %v313
  %315 = vdwg.mxu0
  %v316 = vxor.u32 %v277, 2147483648
  %v317 = vxor.u32 %v279, 2147483648
  %v318 = vxor.u32 %v282, 2147483648
  %v319 = vxor.u32 %v284, 2147483648
  %v320 = vxor.u32 %v287, 2147483648
  %v321 = vxor.u32 %v289, 2147483648
  %v322 = vxor.u32 %v292, 2147483648
  %v323 = vxor.u32 %v294, 2147483648
  %v324 = vxor.u32 %v297, 2147483648
  %v325 = vxor.u32 %v299, 2147483648
  %v326 = vxor.u32 %v302, 2147483648
  %v327 = vxor.u32 %v304, 2147483648
  %v328 = vxor.u32 %v307, 2147483648
  %v329 = vxor.u32 %v309, 2147483648
  %v330 = vxor.u32 %v312, 2147483648
  %v331 = vxor.u32 %v314, 2147483648
  %v332 = vmul.f32 %v316, 1.442695
  %v333 = vpow.pop %v332
  %v334 = vmul.f32 %v317, 1.442695
  %v335 = vpow.pop %v334
  %v336 = vmul.f32 %v318, 1.442695
  %v337 = vpow.pop %v336
  %v338 = vmul.f32 %v319, 1.442695
  %v339 = vpow.pop %v338
  %v340 = vmul.f32 %v320, 1.442695
  %v341 = vpow.pop %v340
  %v342 = vmul.f32 %v321, 1.442695
  %v343 = vpow.pop %v342
  %v344 = vmul.f32 %v322, 1.442695
  %v345 = vpow.pop %v344
  %v346 = vmul.f32 %v323, 1.442695
  %v347 = vpow.pop %v346
  %v348 = vmul.f32 %v324, 1.442695
  %v349 = vpow.pop %v348
  %v350 = vmul.f32 %v325, 1.442695
  %v351 = vpow.pop %v350
  %v352 = vmul.f32 %v326, 1.442695
  %v353 = vpow.pop %v352
  %v354 = vmul.f32 %v327, 1.442695
  %v355 = vpow.pop %v354
  %v356 = vmul.f32 %v328, 1.442695
  %v357 = vpow.pop %v356
  %v358 = vmul.f32 %v329, 1.442695
  %v359 = vpow.pop %v358
  %v360 = vmul.f32 %v330, 1.442695
  %v361 = vpow.pop %v360
  %v362 = vmul.f32 %v331, 1.442695
  %v363 = vpow.pop %v362
  %v364 = vadd.f32 %v333, 1.0
  %v365 = vadd.f32 %v335, 1.0
  %v366 = vadd.f32 %v337, 1.0
  %v367 = vadd.f32 %v339, 1.0
  %v368 = vadd.f32 %v341, 1.0
  %v369 = vadd.f32 %v343, 1.0
  %v370 = vadd.f32 %v345, 1.0
  %v371 = vadd.f32 %v347, 1.0
  %v372 = vadd.f32 %v349, 1.0
  %v373 = vadd.f32 %v351, 1.0
  %v374 = vadd.f32 %v353, 1.0
  %v375 = vadd.f32 %v355, 1.0
  %v376 = vadd.f32 %v357, 1.0
  %v377 = vadd.f32 %v359, 1.0
  %v378 = vadd.f32 %v361, 1.0
  %v379 = vadd.f32 %v363, 1.0
  %v380 = vrcp.pop %v364
  %v381 = vmul.f32 %v364, %v380
  %v382 = vsub.f32 1.0, %v381
  %v383 = vmul.f32 %v380, %v382
  %v384 = vadd.f32 %v380, %v383
  %vm385 = vweird.f32 %v364
  %vm386 = vweird.f32 %v380
  %vm387 = vmor %vm385, %vm386
  %v388 = vsel %vm387, %v380, %v384
  %v389 = vand.u32 2147483647, %v364
  %vm390 = vcmp.eq.f32.partialorder %v389, 8.507059e+37
  %v391 = vand.u32 %v364, 2147483648
  %v392 = vor.u32 1.1754944e-38, %v391
  %v393 = vsel %vm390, %v392, %v388
  %v394 = vmul.f32 1.0, %v393
  %v395 = vrcp.pop %v365
  %v396 = vmul.f32 %v365, %v395
  %v397 = vsub.f32 1.0, %v396
  %v398 = vmul.f32 %v395, %v397
  %v399 = vadd.f32 %v395, %v398
  %vm400 = vweird.f32 %v365
  %vm401 = vweird.f32 %v395
  %vm402 = vmor %vm400, %vm401
  %v403 = vsel %vm402, %v395, %v399
  %v404 = vand.u32 2147483647, %v365
  %vm405 = vcmp.eq.f32.partialorder %v404, 8.507059e+37
  %v406 = vand.u32 %v365, 2147483648
  %v407 = vor.u32 1.1754944e-38, %v406
  %v408 = vsel %vm405, %v407, %v403
  %v409 = vmul.f32 1.0, %v408
  %v410 = vrcp.pop %v366
  %v411 = vmul.f32 %v366, %v410
  %v412 = vsub.f32 1.0, %v411
  %v413 = vmul.f32 %v410, %v412
  %v414 = vadd.f32 %v410, %v413
  %vm415 = vweird.f32 %v366
  %vm416 = vweird.f32 %v410
  %vm417 = vmor %vm415, %vm416
  %v418 = vsel %vm417, %v410, %v414
  %v419 = vand.u32 2147483647, %v366
  %vm420 = vcmp.eq.f32.partialorder %v419, 8.507059e+37
  %v421 = vand.u32 %v366, 2147483648
  %v422 = vor.u32 1.1754944e-38, %v421
  %v423 = vsel %vm420, %v422, %v418
  %v424 = vmul.f32 1.0, %v423
  %v425 = vrcp.pop %v367
  %v426 = vmul.f32 %v367, %v425
  %v427 = vsub.f32 1.0, %v426
  %v428 = vmul.f32 %v425, %v427
  %v429 = vadd.f32 %v425, %v428
  %vm430 = vweird.f32 %v367
  %vm431 = vweird.f32 %v425
  %vm432 = vmor %vm430, %vm431
  %v433 = vsel %vm432, %v425, %v429
  %v434 = vand.u32 2147483647, %v367
  %vm435 = vcmp.eq.f32.partialorder %v434, 8.507059e+37
  %v436 = vand.u32 %v367, 2147483648
  %v437 = vor.u32 1.1754944e-38, %v436
  %v438 = vsel %vm435, %v437, %v433
  %v439 = vmul.f32 1.0, %v438
  %v440 = vrcp.pop %v368
  %v441 = vmul.f32 %v368, %v440
  %v442 = vsub.f32 1.0, %v441
  %v443 = vmul.f32 %v440, %v442
  %v444 = vadd.f32 %v440, %v443
  %vm445 = vweird.f32 %v368
  %vm446 = vweird.f32 %v440
  %vm447 = vmor %vm445, %vm446
  %v448 = vsel %vm447, %v440, %v444
  %v449 = vand.u32 2147483647, %v368
  %vm450 = vcmp.eq.f32.partialorder %v449, 8.507059e+37
  %v451 = vand.u32 %v368, 2147483648
  %v452 = vor.u32 1.1754944e-38, %v451
  %v453 = vsel %vm450, %v452, %v448
  %v454 = vmul.f32 1.0, %v453
  %v455 = vrcp.pop %v369
  %v456 = vmul.f32 %v369, %v455
  %v457 = vsub.f32 1.0, %v456
  %v458 = vmul.f32 %v455, %v457
  %v459 = vadd.f32 %v455, %v458
  %vm460 = vweird.f32 %v369
  %vm461 = vweird.f32 %v455
  %vm462 = vmor %vm460, %vm461
  %v463 = vsel %vm462, %v455, %v459
  %v464 = vand.u32 2147483647, %v369
  %vm465 = vcmp.eq.f32.partialorder %v464, 8.507059e+37
  %v466 = vand.u32 %v369, 2147483648
  %v467 = vor.u32 1.1754944e-38, %v466
  %v468 = vsel %vm465, %v467, %v463
  %v469 = vmul.f32 1.0, %v468
  %v470 = vrcp.pop %v370
  %v471 = vmul.f32 %v370, %v470
  %v472 = vsub.f32 1.0, %v471
  %v473 = vmul.f32 %v470, %v472
  %v474 = vadd.f32 %v470, %v473
  %vm475 = vweird.f32 %v370
  %vm476 = vweird.f32 %v470
  %vm477 = vmor %vm475, %vm476
  %v478 = vsel %vm477, %v470, %v474
  %v479 = vand.u32 2147483647, %v370
  %vm480 = vcmp.eq.f32.partialorder %v479, 8.507059e+37
  %v481 = vand.u32 %v370, 2147483648
  %v482 = vor.u32 1.1754944e-38, %v481
  %v483 = vsel %vm480, %v482, %v478
  %v484 = vmul.f32 1.0, %v483
  %v485 = vrcp.pop %v371
  %v486 = vmul.f32 %v371, %v485
  %v487 = vsub.f32 1.0, %v486
  %v488 = vmul.f32 %v485, %v487
  %v489 = vadd.f32 %v485, %v488
  %vm490 = vweird.f32 %v371
  %vm491 = vweird.f32 %v485
  %vm492 = vmor %vm490, %vm491
  %v493 = vsel %vm492, %v485, %v489
  %v494 = vand.u32 2147483647, %v371
  %vm495 = vcmp.eq.f32.partialorder %v494, 8.507059e+37
  %v496 = vand.u32 %v371, 2147483648
  %v497 = vor.u32 1.1754944e-38, %v496
  %v498 = vsel %vm495, %v497, %v493
  %v499 = vmul.f32 1.0, %v498
  %v500 = vrcp.pop %v372
  %v501 = vmul.f32 %v372, %v500
  %v502 = vsub.f32 1.0, %v501
  %v503 = vmul.f32 %v500, %v502
  %v504 = vadd.f32 %v500, %v503
  %vm505 = vweird.f32 %v372
  %vm506 = vweird.f32 %v500
  %vm507 = vmor %vm505, %vm506
  %v508 = vsel %vm507, %v500, %v504
  %v509 = vand.u32 2147483647, %v372
  %vm510 = vcmp.eq.f32.partialorder %v509, 8.507059e+37
  %v511 = vand.u32 %v372, 2147483648
  %v512 = vor.u32 1.1754944e-38, %v511
  %v513 = vsel %vm510, %v512, %v508
  %v514 = vmul.f32 1.0, %v513
  %v515 = vrcp.pop %v373
  %v516 = vmul.f32 %v373, %v515
  %v517 = vsub.f32 1.0, %v516
  %v518 = vmul.f32 %v515, %v517
  %v519 = vadd.f32 %v515, %v518
  %vm520 = vweird.f32 %v373
  %vm521 = vweird.f32 %v515
  %vm522 = vmor %vm520, %vm521
  %v523 = vsel %vm522, %v515, %v519
  %v524 = vand.u32 2147483647, %v373
  %vm525 = vcmp.eq.f32.partialorder %v524, 8.507059e+37
  %v526 = vand.u32 %v373, 2147483648
  %v527 = vor.u32 1.1754944e-38, %v526
  %v528 = vsel %vm525, %v527, %v523
  %v529 = vmul.f32 1.0, %v528
  %v530 = vrcp.pop %v374
  %v531 = vmul.f32 %v374, %v530
  %v532 = vsub.f32 1.0, %v531
  %v533 = vmul.f32 %v530, %v532
  %v534 = vadd.f32 %v530, %v533
  %vm535 = vweird.f32 %v374
  %vm536 = vweird.f32 %v530
  %vm537 = vmor %vm535, %vm536
  %v538 = vsel %vm537, %v530, %v534
  %v539 = vand.u32 2147483647, %v374
  %vm540 = vcmp.eq.f32.partialorder %v539, 8.507059e+37
  %v541 = vand.u32 %v374, 2147483648
  %v542 = vor.u32 1.1754944e-38, %v541
  %v543 = vsel %vm540, %v542, %v538
  %v544 = vmul.f32 1.0, %v543
  %v545 = vrcp.pop %v375
  %v546 = vmul.f32 %v375, %v545
  %v547 = vsub.f32 1.0, %v546
  %v548 = vmul.f32 %v545, %v547
  %v549 = vadd.f32 %v545, %v548
  %vm550 = vweird.f32 %v375
  %vm551 = vweird.f32 %v545
  %vm552 = vmor %vm550, %vm551
  %v553 = vsel %vm552, %v545, %v549
  %v554 = vand.u32 2147483647, %v375
  %vm555 = vcmp.eq.f32.partialorder %v554, 8.507059e+37
  %v556 = vand.u32 %v375, 2147483648
  %v557 = vor.u32 1.1754944e-38, %v556
  %v558 = vsel %vm555, %v557, %v553
  %v559 = vmul.f32 1.0, %v558
  %v560 = vrcp.pop %v376
  %v561 = vmul.f32 %v376, %v560
  %v562 = vsub.f32 1.0, %v561
  %v563 = vmul.f32 %v560, %v562
  %v564 = vadd.f32 %v560, %v563
  %vm565 = vweird.f32 %v376
  %vm566 = vweird.f32 %v560
  %vm567 = vmor %vm565, %vm566
  %v568 = vsel %vm567, %v560, %v564
  %v569 = vand.u32 2147483647, %v376
  %vm570 = vcmp.eq.f32.partialorder %v569, 8.507059e+37
  %v571 = vand.u32 %v376, 2147483648
  %v572 = vor.u32 1.1754944e-38, %v571
  %v573 = vsel %vm570, %v572, %v568
  %v574 = vmul.f32 1.0, %v573
  %v575 = vrcp.pop %v377
  %v576 = vmul.f32 %v377, %v575
  %v577 = vsub.f32 1.0, %v576
  %v578 = vmul.f32 %v575, %v577
  %v579 = vadd.f32 %v575, %v578
  %vm580 = vweird.f32 %v377
  %vm581 = vweird.f32 %v575
  %vm582 = vmor %vm580, %vm581
  %v583 = vsel %vm582, %v575, %v579
  %v584 = vand.u32 2147483647, %v377
  %vm585 = vcmp.eq.f32.partialorder %v584, 8.507059e+37
  %v586 = vand.u32 %v377, 2147483648
  %v587 = vor.u32 1.1754944e-38, %v586
  %v588 = vsel %vm585, %v587, %v583
  %v589 = vmul.f32 1.0, %v588
  %v590 = vrcp.pop %v378
  %v591 = vmul.f32 %v378, %v590
  %v592 = vsub.f32 1.0, %v591
  %v593 = vmul.f32 %v590, %v592
  %v594 = vadd.f32 %v590, %v593
  %vm595 = vweird.f32 %v378
  %vm596 = vweird.f32 %v590
  %vm597 = vmor %vm595, %vm596
  %v598 = vsel %vm597, %v590, %v594
  %v599 = vand.u32 2147483647, %v378
  %vm600 = vcmp.eq.f32.partialorder %v599, 8.507059e+37
  %v601 = vand.u32 %v378, 2147483648
  %v602 = vor.u32 1.1754944e-38, %v601
  %v603 = vsel %vm600, %v602, %v598
  %v604 = vmul.f32 1.0, %v603
  %v605 = vrcp.pop %v379
  %v606 = vmul.f32 %v379, %v605
  %v607 = vsub.f32 1.0, %v606
  %v608 = vmul.f32 %v605, %v607
  %v609 = vadd.f32 %v605, %v608
  %vm610 = vweird.f32 %v379
  %vm611 = vweird.f32 %v605
  %vm612 = vmor %vm610, %vm611
  %v613 = vsel %vm612, %v605, %v609
  %v614 = vand.u32 2147483647, %v379
  %vm615 = vcmp.eq.f32.partialorder %v614, 8.507059e+37
  %v616 = vand.u32 %v379, 2147483648
  %v617 = vor.u32 1.1754944e-38, %v616
  %v618 = vsel %vm615, %v617, %v613
  %v619 = vmul.f32 1.0, %v618
  %v620 = vmul.f32 %v277, %v394
  %v621 = vmul.f32 %v279, %v409
  %v622 = vmul.f32 %v282, %v424
  %v623 = vmul.f32 %v284, %v439
  %v624 = vmul.f32 %v287, %v454
  %v625 = vmul.f32 %v289, %v469
  %v626 = vmul.f32 %v292, %v484
  %v627 = vmul.f32 %v294, %v499
  %v628 = vmul.f32 %v297, %v514
  %v629 = vmul.f32 %v299, %v529
  %v630 = vmul.f32 %v302, %v544
  %v631 = vmul.f32 %v304, %v559
  %v632 = vmul.f32 %v307, %v574
  %v633 = vmul.f32 %v309, %v589
  %v634 = vmul.f32 %v312, %v604
  %v635 = vmul.f32 %v314, %v619
  %v636 = vmul.f32 %v228, %v620
  %v637 = vmul.f32 %v230, %v621
  %v638 = vmul.f32 %v233, %v622
  %v639 = vmul.f32 %v235, %v623
  %v640 = vmul.f32 %v238, %v624
  %v641 = vmul.f32 %v240, %v625
  %v642 = vmul.f32 %v243, %v626
  %v643 = vmul.f32 %v245, %v627
  %v644 = vmul.f32 %v248, %v628
  %v645 = vmul.f32 %v250, %v629
  %v646 = vmul.f32 %v253, %v630
  %v647 = vmul.f32 %v255, %v631
  %v648 = vmul.f32 %v258, %v632
  %v649 = vmul.f32 %v260, %v633
  %v650 = vmul.f32 %v263, %v634
  %v651 = vmul.f32 %v265, %v635
  %v652 = vpack.c.bf16 %v637, %v636
  %v653 = vpack.c.bf16 %v639, %v638
  %v654 = vpack.c.bf16 %v641, %v640
  %v655 = vpack.c.bf16 %v643, %v642
  %v656 = vpack.c.bf16 %v645, %v644
  %v657 = vpack.c.bf16 %v647, %v646
  %v658 = vpack.c.bf16 %v649, %v648
  %v659 = vpack.c.bf16 %v651, %v650
  %v660 = vld [vmem:[%s3] sm:$0xf]
  %v661 = vld [vmem:[%s3 + $0x4] sm:$0xf]
  %v662 = vld [vmem:[%s3 + $0x8] sm:$0xf]
  %v663 = vld [vmem:[%s3 + $0xc] sm:$0xf]
  %v664 = vld [vmem:[%s3 + $0x10] sm:$0xf]
  %v665 = vld [vmem:[%s3 + $0x14] sm:$0xf]
  %v666 = vld [vmem:[%s3 + $0x18] sm:$0xf]
  %v667 = vld [vmem:[%s3 + $0x1c] sm:$0xf]
  %v668 = vld [vmem:[%s3 + $0x20] sm:$0xf]
  %v669 = vld [vmem:[%s3 + $0x24] sm:$0xf]
  %v670 = vld [vmem:[%s3 + $0x28] sm:$0xf]
  %v671 = vld [vmem:[%s3 + $0x2c] sm:$0xf]
  %v672 = vld [vmem:[%s3 + $0x30] sm:$0xf]
  %v673 = vld [vmem:[%s3 + $0x34] sm:$0xf]
  %v674 = vld [vmem:[%s3 + $0x38] sm:$0xf]
  %v675 = vld [vmem:[%s3 + $0x3c] sm:$0xf]
  %v676 = vld [vmem:[%s4] sm:$0x1]
  %v678 = vperm.slane %v676, 0
  %v696 = vunpack.c.l.b16 %v660
  %v697 = vunpack.c.l.b16 %v661
  %v698 = vunpack.c.l.b16 %v662
  %v699 = vunpack.c.l.b16 %v663
  %v700 = vunpack.c.l.b16 %v664
  %v701 = vunpack.c.l.b16 %v665
  %v702 = vunpack.c.l.b16 %v666
  %v703 = vunpack.c.l.b16 %v667
  %v704 = vunpack.c.l.b16 %v668
  %v705 = vunpack.c.l.b16 %v669
  %v706 = vunpack.c.l.b16 %v670
  %v707 = vunpack.c.l.b16 %v671
  %v708 = vunpack.c.l.b16 %v672
  %v709 = vunpack.c.l.b16 %v673
  %v710 = vunpack.c.l.b16 %v674
  %v711 = vunpack.c.l.b16 %v675
  %v712 = vpack.c.b16 %v697, %v696
  %v713 = vpack.c.b16 %v699, %v698
  %v714 = vpack.c.b16 %v701, %v700
  %v715 = vpack.c.b16 %v703, %v702
  %v716 = vpack.c.b16 %v705, %v704
  %v717 = vpack.c.b16 %v707, %v706
  %v718 = vpack.c.b16 %v709, %v708
  %v719 = vpack.c.b16 %v711, %v710
  %728 = vmatpush.bf16.xpose.msra.mxu0 %v719
  %729 = vmatpush.bf16.xpose.msra.mxu0 %v718
  %730 = vmatpush.bf16.xpose.msra.mxu0 %v717
  %731 = vmatpush.bf16.xpose.msra.mxu0 %v716
  %732 = vmatpush.bf16.xpose.msra.mxu0 %v715
  %733 = vmatpush.bf16.xpose.msra.mxu0 %v714
  %734 = vmatpush.bf16.xpose.msra.mxu0 %v713
  %735 = vmatpush.bf16.xpose.msra.mxu0 %v712
  %736 = vmatmul.bf16.gmra.mxu0 %v652
  %v737 = vpop.f32.mrf.mxu0
  %v738 = vadd.f32 %v678, %v737
  %v739 = vpop.f32.mrf.mxu0
  %v740 = vadd.f32 %v678, %v739
  %741 = vmatmul.bf16.gmra.mxu0 %v653
  %v742 = vpop.f32.mrf.mxu0
  %v743 = vadd.f32 %v678, %v742
  %v744 = vpop.f32.mrf.mxu0
  %v745 = vadd.f32 %v678, %v744
  %746 = vmatmul.bf16.gmra.mxu0 %v654
  %v747 = vpop.f32.mrf.mxu0
  %v748 = vadd.f32 %v678, %v747
  %v749 = vpop.f32.mrf.mxu0
  %v750 = vadd.f32 %v678, %v749
  %751 = vmatmul.bf16.gmra.mxu0 %v655
  %v752 = vpop.f32.mrf.mxu0
  %v753 = vadd.f32 %v678, %v752
  %v754 = vpop.f32.mrf.mxu0
  %v755 = vadd.f32 %v678, %v754
  %756 = vmatmul.bf16.gmra.mxu0 %v656
  %v757 = vpop.f32.mrf.mxu0
  %v758 = vadd.f32 %v678, %v757
  %v759 = vpop.f32.mrf.mxu0
  %v760 = vadd.f32 %v678, %v759
  %761 = vmatmul.bf16.gmra.mxu0 %v657
  %v762 = vpop.f32.mrf.mxu0
  %v763 = vadd.f32 %v678, %v762
  %v764 = vpop.f32.mrf.mxu0
  %v765 = vadd.f32 %v678, %v764
  %766 = vmatmul.bf16.gmra.mxu0 %v658
  %v767 = vpop.f32.mrf.mxu0
  %v768 = vadd.f32 %v678, %v767
  %v769 = vpop.f32.mrf.mxu0
  %v770 = vadd.f32 %v678, %v769
  %771 = vmatmul.bf16.gmra.mxu0 %v659
  %v772 = vpop.f32.mrf.mxu0
  %v773 = vadd.f32 %v678, %v772
  %v774 = vpop.f32.mrf.mxu0
  %v775 = vadd.f32 %v678, %v774
  %776 = vdwg.mxu0
  %777 = vst [vmem:[%s5] sm:$0xff] %v738
  %778 = vst [vmem:[%s5 + $0x8] sm:$0xff] %v740
  %779 = vst [vmem:[%s5 + $0x10] sm:$0xff] %v743
  %780 = vst [vmem:[%s5 + $0x18] sm:$0xff] %v745
  %781 = vst [vmem:[%s5 + $0x20] sm:$0xff] %v748
  %782 = vst [vmem:[%s5 + $0x28] sm:$0xff] %v750
  %783 = vst [vmem:[%s5 + $0x30] sm:$0xff] %v753
  %784 = vst [vmem:[%s5 + $0x38] sm:$0xff] %v755
  %785 = vst [vmem:[%s5 + $0x40] sm:$0xff] %v758
  %786 = vst [vmem:[%s5 + $0x48] sm:$0xff] %v760
  %787 = vst [vmem:[%s5 + $0x50] sm:$0xff] %v763
  %788 = vst [vmem:[%s5 + $0x58] sm:$0xff] %v765
  %789 = vst [vmem:[%s5 + $0x60] sm:$0xff] %v768
  %790 = vst [vmem:[%s5 + $0x68] sm:$0xff] %v770
  %791 = vst [vmem:[%s5 + $0x70] sm:$0xff] %v773
  %792 = vst [vmem:[%s5 + $0x78] sm:$0xff] %v775
  // Predicated region
  $region22: #{gated_mlp.1} parent=0 // pred_check
    _
  $region23: #{gated_mlp.1} parent=0 // pred_check_branch
    %794 = sbr.rel (0) target = $region25
  $region24: #{gated_mlp.1} parent=0 // pred_region
    _
  $region25: #{gated_mlp.1} parent=0 // pred_fallthru
    _
  // Predicated region
  $region26: #{gated_mlp.1} parent=0 // pred_check
    _
  $region27: #{gated_mlp.1} parent=0 // pred_check_branch
    %796 = sbr.rel (0) target = $region29
  $region28: #{gated_mlp.1} parent=0 // pred_region
    _
  $region29: #{gated_mlp.1} parent=0 // pred_fallthru
    _

</llo_original>
